<compile_context>
chip_gen: v6e
topology: v6e:2x2x1
jax: 0.10.0
libtpu: 0.0.40
codegen_flags: <defaults>
</compile_context>

<pallas_src>
import jax
import jax.numpy as jnp
from jax.experimental import pallas as pl
from jax.experimental.pallas import tpu as pltpu

NUM_INPUTS = 4
NUM_ACTIONS = 3
HIDDEN = 64
SUM_COL = NUM_ACTIONS     # head column carrying the per-row advantage sum
HEAD_W = 8                # small head slab: 3 Q cols + 1 sum col + 4 zero pad


def dueling_q_kernel(x_ref,
                     w1_ref, b1_ref,
                     wb_ref, bb_ref,   # fused advantage|value hidden layer (64,128)
                     wh_ref, bh_ref,   # fused head (128,8): Q cols + adv-sum col
                     out_ref):
    x = x_ref[...]

    # linear1 + ReLU
    h = jnp.dot(x, w1_ref[...], preferred_element_type=jnp.float32) + b1_ref[...]
    h = jnp.maximum(h, 0.0)

    # fused branch layer: cols 0:64 = advantage hidden, cols 64:128 = value hidden
    branch = jnp.dot(h, wb_ref[...], preferred_element_type=jnp.float32) + bb_ref[...]
    branch = jnp.maximum(branch, 0.0)

    # fused head:
    #   cols 0:NUM_ACTIONS already equal advantage + value (value2 folded on host)
    #   col  SUM_COL        equals the per-row advantage sum
    head = jnp.dot(branch, wh_ref[...], preferred_element_type=jnp.float32) + bh_ref[...]

    # advantage mean over ALL advantage elements (B * NUM_ACTIONS), kept as (1,1)
    adv_mean = jnp.sum(head[:, SUM_COL:SUM_COL + 1], keepdims=True) * (
        1.0 / (head.shape[0] * NUM_ACTIONS))

    # dueling combine; only cols 0:NUM_ACTIONS are meaningful (wrapper slices).
    out_ref[...] = (head - adv_mean).astype(out_ref.dtype)


@jax.jit
def dueling_q_forward(x, fused_params):
    """x: (B, NUM_INPUTS) float32 -> (B, NUM_ACTIONS) float32. One fused dispatch."""
    B = x.shape[0]
    vmem = pl.BlockSpec(memory_space=pltpu.MemorySpace.VMEM)
    out_pad = pl.pallas_call(
        dueling_q_kernel,
        out_shape=jax.ShapeDtypeStruct((B, HEAD_W), jnp.float32),
        in_specs=[vmem] * (1 + len(fused_params)),
        out_specs=vmem,
    )(x, *fused_params)
    return out_pad[:, :NUM_ACTIONS]


def init_params(key):
    """Deterministic init mimicking nn.Linear's U(-1/sqrt(fan_in), 1/sqrt(fan_in)).

    Weights stored as (in_features, out_features); biases as (1, out)."""
    def linear(key, fan_in, fan_out):
        kw, kb = jax.random.split(key)
        bound = 1.0 / jnp.sqrt(jnp.float32(fan_in))
        w = jax.random.uniform(kw, (fan_in, fan_out), jnp.float32, -bound, bound)
        b = jax.random.uniform(kb, (1, fan_out), jnp.float32, -bound, bound)
        return w, b

    k1, k2, k3, k4, k5 = jax.random.split(key, 5)
    w1, b1 = linear(k1, NUM_INPUTS, HIDDEN)     # linear1
    wa, ba = linear(k2, HIDDEN, HIDDEN)         # advantage
    wa2, ba2 = linear(k3, HIDDEN, NUM_ACTIONS)  # advantage2
    wv, bv = linear(k4, HIDDEN, HIDDEN)         # value
    wv2, bv2 = linear(k5, HIDDEN, 1)            # value2
    return (w1, b1, wa, ba, wa2, ba2, wv, bv, wv2, bv2)


def fuse_params(params):
    """Host-side, one-time fusion of the per-layer weights.

    Returns (w1, b1, w_branch, b_branch, w_head, b_head):
      w_branch (64,128) = [advantage | value] hidden weights
      w_head   (128,8)  = cols 0:3  -> advantage2 (rows 0:64) + value2 broadcast
                                       (rows 64:128)  => head[:,j] = adv[:,j]+val
                          col 3     -> wa2.sum(axis=1) (rows 0:64)
                                       => head[:,3] = sum_j adv[:,j]
                          cols 4:8  -> zero padding (keeps last dim a power of 2)
    """
    w1, b1, wa, ba, wa2, ba2, wv, bv, wv2, bv2 = params

    w_branch = jnp.concatenate([wa, wv], axis=1)             # (64, 128)
    b_branch = jnp.concatenate([ba, bv], axis=1)             # (1, 128)

    w_head = jnp.zeros((2 * HIDDEN, HEAD_W), jnp.float32)
    w_head = w_head.at[:HIDDEN, :NUM_ACTIONS].set(wa2)
    w_head = w_head.at[HIDDEN:, :NUM_ACTIONS].set(
        jnp.broadcast_to(wv2, (HIDDEN, NUM_ACTIONS)))         # fold value into Q cols
    w_head = w_head.at[:HIDDEN, SUM_COL].set(wa2.sum(axis=1))  # advantage-sum column

    b_head = jnp.zeros((1, HEAD_W), jnp.float32)
    b_head = b_head.at[:, :NUM_ACTIONS].set(ba2 + bv2)        # adv bias + val bias
    b_head = b_head.at[:, SUM_COL].set(jnp.sum(ba2))

    return (w1, b1, w_branch, b_branch, w_head, b_head)


def reference_forward(x, params):
    """Pure-JAX reference replicating the PyTorch forward exactly."""
    w1, b1, wa, ba, wa2, ba2, wv, bv, wv2, bv2 = params
    h = jnp.maximum(x @ w1 + b1, 0.0)
    a = jnp.maximum(h @ wa + ba, 0.0)
    adv = a @ wa2 + ba2
    v = jnp.maximum(h @ wv + bv, 0.0)
    val = v @ wv2 + bv2
    return val + adv - jnp.mean(adv)


if __name__ == "__main__":
    key = jax.random.PRNGKey(0)
    k_param, k_x = jax.random.split(key)

    params = init_params(k_param)
    fused = fuse_params(params)   # done once on the host; reused every call

    B = 8  # small batch of environment observations
    x = jax.random.normal(k_x, (B, NUM_INPUTS), jnp.float32)

    out = dueling_q_forward(x, fused)
    out = jax.block_until_ready(out)

    ref = reference_forward(x, params)
    assert out.shape == (B, NUM_ACTIONS)
    assert jnp.allclose(out, ref, atol=1e-5, rtol=1e-5)

    print("KERNEL_OK")
</pallas_src>

<mosaic_0001>
module attributes {stable_mosaic.version = 11 : i64} {
  func.func @dueling_q_kernel(%arg0: memref<8x4xf32, #tpu.memory_space<vmem>>, %arg1: memref<4x64xf32, #tpu.memory_space<vmem>>, %arg2: memref<1x64xf32, #tpu.memory_space<vmem>>, %arg3: memref<64x128xf32, #tpu.memory_space<vmem>>, %arg4: memref<1x128xf32, #tpu.memory_space<vmem>>, %arg5: memref<128x8xf32, #tpu.memory_space<vmem>>, %arg6: memref<1x8xf32, #tpu.memory_space<vmem>>, %arg7: memref<8x8xf32, #tpu.memory_space<vmem>>) attributes {dimension_semantics = [], scalar_prefetch = 0 : i64, scratch_operands = 0 : i64, tpu.core_type = #tpu.core_type<tc>} {
    %c0 = arith.constant 0 : index
    %c0_0 = arith.constant 0 : index
    %0 = vector.load %arg0[%c0, %c0_0] : memref<8x4xf32, #tpu.memory_space<vmem>>, vector<8x4xf32>
    %c0_1 = arith.constant 0 : index
    %c0_2 = arith.constant 0 : index
    %1 = vector.load %arg1[%c0_1, %c0_2] : memref<4x64xf32, #tpu.memory_space<vmem>>, vector<4x64xf32>
    %cst = arith.constant dense<0.000000e+00> : vector<8x64xf32>
    %2 = tpu.matmul %0, %1, %cst {dimension_numbers = #tpu.dot_dimension_numbers<[1], [0], [0], [1], [0, 0, 1, 1], [], []>} : vector<8x4xf32>, vector<4x64xf32>, vector<8x64xf32> -> vector<8x64xf32>
    %c0_3 = arith.constant 0 : index
    %c0_4 = arith.constant 0 : index
    %3 = vector.load %arg2[%c0_3, %c0_4] : memref<1x64xf32, #tpu.memory_space<vmem>>, vector<1x64xf32>
    %4 = vector.broadcast %3 : vector<1x64xf32> to vector<8x64xf32>
    %5 = arith.addf %2, %4 : vector<8x64xf32>
    %cst_5 = arith.constant 0.000000e+00 : f32
    %6 = vector.broadcast %cst_5 : f32 to vector<8x64xf32>
    %7 = arith.maximumf %5, %6 : vector<8x64xf32>
    %c0_6 = arith.constant 0 : index
    %c0_7 = arith.constant 0 : index
    %8 = vector.load %arg3[%c0_6, %c0_7] : memref<64x128xf32, #tpu.memory_space<vmem>>, vector<64x128xf32>
    %cst_8 = arith.constant dense<0.000000e+00> : vector<8x128xf32>
    %9 = tpu.matmul %7, %8, %cst_8 {dimension_numbers = #tpu.dot_dimension_numbers<[1], [0], [0], [1], [0, 0, 1, 1], [], []>} : vector<8x64xf32>, vector<64x128xf32>, vector<8x128xf32> -> vector<8x128xf32>
    %c0_9 = arith.constant 0 : index
    %c0_10 = arith.constant 0 : index
    %10 = vector.load %arg4[%c0_9, %c0_10] : memref<1x128xf32, #tpu.memory_space<vmem>>, vector<1x128xf32>
    %11 = vector.broadcast %10 : vector<1x128xf32> to vector<8x128xf32>
    %12 = arith.addf %9, %11 : vector<8x128xf32>
    %cst_11 = arith.constant 0.000000e+00 : f32
    %13 = vector.broadcast %cst_11 : f32 to vector<8x128xf32>
    %14 = arith.maximumf %12, %13 : vector<8x128xf32>
    %c0_12 = arith.constant 0 : index
    %c0_13 = arith.constant 0 : index
    %15 = vector.load %arg5[%c0_12, %c0_13] : memref<128x8xf32, #tpu.memory_space<vmem>>, vector<128x8xf32>
    %cst_14 = arith.constant dense<0.000000e+00> : vector<8x8xf32>
    %16 = tpu.matmul %14, %15, %cst_14 {dimension_numbers = #tpu.dot_dimension_numbers<[1], [0], [0], [1], [0, 0, 1, 1], [], []>} : vector<8x128xf32>, vector<128x8xf32>, vector<8x8xf32> -> vector<8x8xf32>
    %c0_15 = arith.constant 0 : index
    %c0_16 = arith.constant 0 : index
    %17 = vector.load %arg6[%c0_15, %c0_16] : memref<1x8xf32, #tpu.memory_space<vmem>>, vector<1x8xf32>
    %18 = vector.broadcast %17 : vector<1x8xf32> to vector<8x8xf32>
    %19 = arith.addf %16, %18 : vector<8x8xf32>
    %20 = vector.extract_strided_slice %19 {offsets = [0, 3], sizes = [8, 1], strides = [1, 1]} : vector<8x8xf32> to vector<8x1xf32>
    %21 = vector.shape_cast %20 : vector<8x1xf32> to vector<1x8x1xf32>
    %cst_17 = arith.constant dense<0.000000e+00> : vector<1xf32>
    %22 = vector.multi_reduction <add>, %21, %cst_17 [1, 2] : vector<1x8x1xf32> to vector<1xf32>
    %23 = vector.shape_cast %22 : vector<1xf32> to vector<1x1x1xf32>
    %24 = vector.extract %23[0, 0, 0] : f32 from vector<1x1x1xf32>
    %25 = vector.broadcast %24 : f32 to vector<1x1xf32>
    %cst_18 = arith.constant 0.0416666679 : f32
    %26 = vector.broadcast %cst_18 : f32 to vector<1x1xf32>
    %27 = arith.mulf %25, %26 : vector<1x1xf32>
    %28 = vector.broadcast %27 : vector<1x1xf32> to vector<8x8xf32>
    %29 = arith.subf %19, %28 : vector<8x8xf32>
    %c0_19 = arith.constant 0 : index
    %c0_20 = arith.constant 0 : index
    %30 = vector.load %arg7[%c0_19, %c0_20] : memref<8x8xf32, #tpu.memory_space<vmem>>, vector<8x8xf32>
    tpu.vector_store %arg7[%c0_19, %c0_20], %29 {strides = array<i32>} : memref<8x8xf32, #tpu.memory_space<vmem>>, vector<8x8xf32>,
    return
  }
}

</mosaic_0001>

<llo_original>
// kernel: dueling_q_forward.1
$region0: #{dueling_q_forward.1}
  #allocation0 [shape = 'u32[]', space=smem, size = 0x4, offset = 0x4, fixed_abs, tag = 'smem constant byte address 0x4 - core index']
  #allocation1 [shape = 'u32[144,128]{1,0:T(1,128)}', space=vmem, size = 0x12000, scoped, tag = 'internal scratch']
  %s0 = inlined_call_operand.vmem [shape: f32[8,4], index: 0, kind: input, shape index: {}]
  %s1 = inlined_call_operand.vmem [shape: f32[4,64], index: 1, kind: input, shape index: {}]
  %s2 = inlined_call_operand.vmem [shape: f32[1,64], index: 2, kind: input, shape index: {}]
  %s3 = inlined_call_operand.vmem [shape: f32[64,128], index: 3, kind: input, shape index: {}]
  %s4 = inlined_call_operand.vmem [shape: f32[1,128], index: 4, kind: input, shape index: {}]
  %s5 = inlined_call_operand.vmem [shape: f32[128,8], index: 5, kind: input, shape index: {}]
  %s6 = inlined_call_operand.vmem [shape: f32[1,8], index: 6, kind: input, shape index: {}]
  %s7 = inlined_call_operand.vmem [shape: f32[8,8], index: 7, kind: output, shape index: {}]
  %s8 = sld [smem:[#allocation0]]
  $region38: #{dueling_q_forward.1} parent=0
    _
  %s10 = ssub.s32 1, %s8
  %s11 = scalar_select 0, %s10, %s8
  // Predicated region
  $region2: #{dueling_q_forward.1} parent=0 // pred_check
    _
  $region3: #{dueling_q_forward.1} parent=0 // pred_check_branch
    %13 = sbr.rel (0) target = $region5
  $region4: #{dueling_q_forward.1} parent=0 // pred_region
    _
  $region5: #{dueling_q_forward.1} parent=0 // pred_fallthru
    _
  // Predicated region
  $region6: #{dueling_q_forward.1} parent=0 // pred_check
    _
  $region7: #{dueling_q_forward.1} parent=0 // pred_check_branch
    %15 = sbr.rel (0) target = $region9
  $region8: #{dueling_q_forward.1} parent=0 // pred_region
    _
  $region9: #{dueling_q_forward.1} parent=0 // pred_fallthru
    _
  // Predicated region
  $region10: #{dueling_q_forward.1} parent=0 // pred_check
    _
  $region11: #{dueling_q_forward.1} parent=0 // pred_check_branch
    %17 = sbr.rel (0) target = $region13
  $region12: #{dueling_q_forward.1} parent=0 // pred_region
    _
  $region13: #{dueling_q_forward.1} parent=0 // pred_fallthru
    _
  // Predicated region
  $region14: #{dueling_q_forward.1} parent=0 // pred_check
    _
  $region15: #{dueling_q_forward.1} parent=0 // pred_check_branch
    %19 = sbr.rel (0) target = $region17
  $region16: #{dueling_q_forward.1} parent=0 // pred_region
    _
  $region17: #{dueling_q_forward.1} parent=0 // pred_fallthru
    _
  // Predicated region
  $region18: #{dueling_q_forward.1} parent=0 // pred_check
    _
  $region19: #{dueling_q_forward.1} parent=0 // pred_check_branch
    %21 = sbr.rel (0) target = $region21
  $region20: #{dueling_q_forward.1} parent=0 // pred_region
    _
  $region21: #{dueling_q_forward.1} parent=0 // pred_fallthru
    _
  // Predicated region
  $region22: #{dueling_q_forward.1} parent=0 // pred_check
    _
  $region23: #{dueling_q_forward.1} parent=0 // pred_check_branch
    %23 = sbr.rel (0) target = $region25
  $region24: #{dueling_q_forward.1} parent=0 // pred_region
    _
  $region25: #{dueling_q_forward.1} parent=0 // pred_fallthru
    _
  // Predicated region
  $region26: #{dueling_q_forward.1} parent=0 // pred_check
    _
  $region27: #{dueling_q_forward.1} parent=0 // pred_check_branch
    %25 = sbr.rel (0) target = $region29
  $region28: #{dueling_q_forward.1} parent=0 // pred_region
    _
  $region29: #{dueling_q_forward.1} parent=0 // pred_fallthru
    _
  %v26 = vld [vmem:[%s0] sm:$0xff]
  %v27 = vld [vmem:[%s1] sm:$0xf]
  %v28 = vld [vmem:[%s2] sm:$0x1]
  %v30 = vlaneseq
  %v31 = vshrl.u32 %v30, 7
  %v32 = vsub.s32 0, %v31
  %v33 = vrot.slane %v28, %v32
  %vm35 = vcmask 31744
  %v37 = vsel %vm35, %v26, 0
  %vm39 = vcmask 1043456
  %v41 = vsel %vm39, %v27, 0
  %43 = vmatprep.subr.mxu0 0.0
  %44 = vmatpush1.msra.mxu0 0.0
  %45 = vmatprep.subr.mxu0 0.0
  %46 = vmatpush1.msra.mxu0 0.0
  %47 = vmatprep.subr.mxu0 0.0
  %48 = vmatpush1.msra.mxu0 0.0
  %49 = vmatprep.subr.mxu0 0.0
  %50 = vmatpush1.msra.mxu0 0.0
  %51 = vmatprep.subr.mxu0 0.0
  %52 = vmatpush1.msra.mxu0 0.0
  %53 = vmatprep.subr.mxu0 0.0
  %54 = vmatpush1.msra.mxu0 0.0
  %55 = vmatprep.subr.mxu0 0.0
  %56 = vmatpush1.msra.mxu0 0.0
  %57 = vmatprep.subr.mxu0 0.0
  %58 = vmatpush1.msra.mxu0 0.0
  %59 = vmatprep.subr.mxu0 0.0
  %60 = vmatpush1.msra.mxu0 0.0
  %61 = vmatprep.subr.mxu0 0.0
  %62 = vmatpush1.msra.mxu0 0.0
  %63 = vmatprep.subr.mxu0 0.0
  %64 = vmatpush1.msra.mxu0 0.0
  %65 = vmatprep.subr.mxu0 0.0
  %66 = vmatpush1.msra.mxu0 0.0
  %67 = vmatprep.subr.mxu0 0.0
  %68 = vmatpush1.msra.mxu0 0.0
  %69 = vmatprep.subr.mxu0 0.0
  %70 = vmatpush1.msra.mxu0 0.0
  %71 = vmatprep.subr.mxu0 0.0
  %72 = vmatpush1.msra.mxu0 0.0
  %73 = vmatprep.subr.mxu0 0.0
  %74 = vmatpush1.msra.mxu0 %v41
  %75 = vmatprep.subr.mxu0 0.0
  %76 = vmatpush2.msra.mxu0 0.0
  %77 = vmatprep.subr.mxu0 0.0
  %78 = vmatpush2.msra.mxu0 0.0
  %79 = vmatprep.subr.mxu0 0.0
  %80 = vmatpush2.msra.mxu0 0.0
  %81 = vmatprep.subr.mxu0 0.0
  %82 = vmatpush2.msra.mxu0 0.0
  %83 = vmatprep.subr.mxu0 0.0
  %84 = vmatpush2.msra.mxu0 0.0
  %85 = vmatprep.subr.mxu0 0.0
  %86 = vmatpush2.msra.mxu0 0.0
  %87 = vmatprep.subr.mxu0 0.0
  %88 = vmatpush2.msra.mxu0 0.0
  %89 = vmatprep.subr.mxu0 0.0
  %90 = vmatpush2.msra.mxu0 0.0
  %91 = vmatprep.subr.mxu0 0.0
  %92 = vmatpush2.msra.mxu0 0.0
  %93 = vmatprep.subr.mxu0 0.0
  %94 = vmatpush2.msra.mxu0 0.0
  %95 = vmatprep.subr.mxu0 0.0
  %96 = vmatpush2.msra.mxu0 0.0
  %97 = vmatprep.subr.mxu0 0.0
  %98 = vmatpush2.msra.mxu0 0.0
  %99 = vmatprep.subr.mxu0 0.0
  %100 = vmatpush2.msra.mxu0 0.0
  %101 = vmatprep.subr.mxu0 0.0
  %102 = vmatpush2.msra.mxu0 0.0
  %103 = vmatprep.subr.mxu0 0.0
  %104 = vmatpush2.msra.mxu0 0.0
  %105 = vmatprep.subr.mxu0 0.0
  %106 = vmatpush2.msra.mxu0 0.0
  %107 = vmatprep.mubr.f32.mxu0 0.0
  %108 = vmatmul.mubr.f32.gmra.mxu0 %v37
  %v109 = vpop.f32.mrf.mxu0
  %v110 = vadd.f32 %v33, %v109
  %v111 = vpop.f32.mrf.mxu0
  %112 = vdwg.mxu0
  %v113 = vmax.f32 %v110, 0.0
  %v114 = vld [vmem:[%s3] sm:$0xff]
  %v115 = vld [vmem:[%s3 + $0x8] sm:$0xff]
  %v116 = vld [vmem:[%s3 + $0x10] sm:$0xff]
  %v117 = vld [vmem:[%s3 + $0x18] sm:$0xff]
  %v118 = vld [vmem:[%s3 + $0x20] sm:$0xff]
  %v119 = vld [vmem:[%s3 + $0x28] sm:$0xff]
  %v120 = vld [vmem:[%s3 + $0x30] sm:$0xff]
  %v121 = vld [vmem:[%s3 + $0x38] sm:$0xff]
  %v122 = vld [vmem:[%s4] sm:$0x1]
  %v124 = vlaneseq
  %v125 = vshrl.u32 %v124, 7
  %v126 = vsub.s32 0, %v125
  %v127 = vrot.slane %v122, %v126
  %vm129 = vcmask 523264
  %v131 = vsel %vm129, %v113, 0
  %133 = vmatprep.subr.mxu0 0.0
  %134 = vmatpush1.msra.mxu0 0.0
  %135 = vmatprep.subr.mxu0 0.0
  %136 = vmatpush1.msra.mxu0 0.0
  %137 = vmatprep.subr.mxu0 0.0
  %138 = vmatpush1.msra.mxu0 0.0
  %139 = vmatprep.subr.mxu0 0.0
  %140 = vmatpush1.msra.mxu0 0.0
  %141 = vmatprep.subr.mxu0 0.0
  %142 = vmatpush1.msra.mxu0 0.0
  %143 = vmatprep.subr.mxu0 0.0
  %144 = vmatpush1.msra.mxu0 0.0
  %145 = vmatprep.subr.mxu0 0.0
  %146 = vmatpush1.msra.mxu0 0.0
  %147 = vmatprep.subr.mxu0 0.0
  %148 = vmatpush1.msra.mxu0 0.0
  %149 = vmatprep.subr.mxu0 0.0
  %150 = vmatpush1.msra.mxu0 %v121
  %151 = vmatprep.subr.mxu0 0.0
  %152 = vmatpush1.msra.mxu0 %v120
  %153 = vmatprep.subr.mxu0 0.0
  %154 = vmatpush1.msra.mxu0 %v119
  %155 = vmatprep.subr.mxu0 0.0
  %156 = vmatpush1.msra.mxu0 %v118
  %157 = vmatprep.subr.mxu0 0.0
  %158 = vmatpush1.msra.mxu0 %v117
  %159 = vmatprep.subr.mxu0 0.0
  %160 = vmatpush1.msra.mxu0 %v116
  %161 = vmatprep.subr.mxu0 0.0
  %162 = vmatpush1.msra.mxu0 %v115
  %163 = vmatprep.subr.mxu0 0.0
  %164 = vmatpush1.msra.mxu0 %v114
  %165 = vmatprep.subr.mxu0 0.0
  %166 = vmatpush2.msra.mxu0 0.0
  %167 = vmatprep.subr.mxu0 0.0
  %168 = vmatpush2.msra.mxu0 0.0
  %169 = vmatprep.subr.mxu0 0.0
  %170 = vmatpush2.msra.mxu0 0.0
  %171 = vmatprep.subr.mxu0 0.0
  %172 = vmatpush2.msra.mxu0 0.0
  %173 = vmatprep.subr.mxu0 0.0
  %174 = vmatpush2.msra.mxu0 0.0
  %175 = vmatprep.subr.mxu0 0.0
  %176 = vmatpush2.msra.mxu0 0.0
  %177 = vmatprep.subr.mxu0 0.0
  %178 = vmatpush2.msra.mxu0 0.0
  %179 = vmatprep.subr.mxu0 0.0
  %180 = vmatpush2.msra.mxu0 0.0
  %181 = vmatprep.subr.mxu0 0.0
  %182 = vmatpush2.msra.mxu0 0.0
  %183 = vmatprep.subr.mxu0 0.0
  %184 = vmatpush2.msra.mxu0 0.0
  %185 = vmatprep.subr.mxu0 0.0
  %186 = vmatpush2.msra.mxu0 0.0
  %187 = vmatprep.subr.mxu0 0.0
  %188 = vmatpush2.msra.mxu0 0.0
  %189 = vmatprep.subr.mxu0 0.0
  %190 = vmatpush2.msra.mxu0 0.0
  %191 = vmatprep.subr.mxu0 0.0
  %192 = vmatpush2.msra.mxu0 0.0
  %193 = vmatprep.subr.mxu0 0.0
  %194 = vmatpush2.msra.mxu0 0.0
  %195 = vmatprep.subr.mxu0 0.0
  %196 = vmatpush2.msra.mxu0 0.0
  %197 = vmatprep.mubr.f32.mxu0 0.0
  %198 = vmatmul.mubr.f32.gmra.mxu0 %v131
  %v199 = vpop.f32.mrf.mxu0
  %v200 = vadd.f32 %v127, %v199
  %v201 = vpop.f32.mrf.mxu0
  %202 = vdwg.mxu0
  %v203 = vmax.f32 %v200, 0.0
  %v204 = vld [vmem:[%s5] sm:$0xff]
  %v205 = vld [vmem:[%s5 + $0x8] sm:$0xff]
  %v206 = vld [vmem:[%s5 + $0x10] sm:$0xff]
  %v207 = vld [vmem:[%s5 + $0x18] sm:$0xff]
  %v208 = vld [vmem:[%s5 + $0x20] sm:$0xff]
  %v209 = vld [vmem:[%s5 + $0x28] sm:$0xff]
  %v210 = vld [vmem:[%s5 + $0x30] sm:$0xff]
  %v211 = vld [vmem:[%s5 + $0x38] sm:$0xff]
  %v212 = vld [vmem:[%s5 + $0x40] sm:$0xff]
  %v213 = vld [vmem:[%s5 + $0x48] sm:$0xff]
  %v214 = vld [vmem:[%s5 + $0x50] sm:$0xff]
  %v215 = vld [vmem:[%s5 + $0x58] sm:$0xff]
  %v216 = vld [vmem:[%s5 + $0x60] sm:$0xff]
  %v217 = vld [vmem:[%s5 + $0x68] sm:$0xff]
  %v218 = vld [vmem:[%s5 + $0x70] sm:$0xff]
  %v219 = vld [vmem:[%s5 + $0x78] sm:$0xff]
  %v220 = vld [vmem:[%s6] sm:$0x1]
  %v222 = vlaneseq
  %v223 = vshrl.u32 %v222, 7
  %v224 = vsub.s32 0, %v223
  %v225 = vrot.slane %v220, %v224
  %227 = vmatprep.subr.mxu0 0.0
  %228 = vmatpush1.msra.mxu0 %v219
  %229 = vmatprep.subr.mxu0 0.0
  %230 = vmatpush1.msra.mxu0 %v218
  %231 = vmatprep.subr.mxu0 0.0
  %232 = vmatpush1.msra.mxu0 %v217
  %233 = vmatprep.subr.mxu0 0.0
  %234 = vmatpush1.msra.mxu0 %v216
  %235 = vmatprep.subr.mxu0 0.0
  %236 = vmatpush1.msra.mxu0 %v215
  %237 = vmatprep.subr.mxu0 0.0
  %238 = vmatpush1.msra.mxu0 %v214
  %239 = vmatprep.subr.mxu0 0.0
  %240 = vmatpush1.msra.mxu0 %v213
  %241 = vmatprep.subr.mxu0 0.0
  %242 = vmatpush1.msra.mxu0 %v212
  %243 = vmatprep.subr.mxu0 0.0
  %244 = vmatpush1.msra.mxu0 %v211
  %245 = vmatprep.subr.mxu0 0.0
  %246 = vmatpush1.msra.mxu0 %v210
  %247 = vmatprep.subr.mxu0 0.0
  %248 = vmatpush1.msra.mxu0 %v209
  %249 = vmatprep.subr.mxu0 0.0
  %250 = vmatpush1.msra.mxu0 %v208
  %251 = vmatprep.subr.mxu0 0.0
  %252 = vmatpush1.msra.mxu0 %v207
  %253 = vmatprep.subr.mxu0 0.0
  %254 = vmatpush1.msra.mxu0 %v206
  %255 = vmatprep.subr.mxu0 0.0
  %256 = vmatpush1.msra.mxu0 %v205
  %257 = vmatprep.subr.mxu0 0.0
  %258 = vmatpush1.msra.mxu0 %v204
  %259 = vmatprep.subr.mxu0 0.0
  %260 = vmatpush2.msra.mxu0 0.0
  %261 = vmatprep.subr.mxu0 0.0
  %262 = vmatpush2.msra.mxu0 0.0
  %263 = vmatprep.subr.mxu0 0.0
  %264 = vmatpush2.msra.mxu0 0.0
  %265 = vmatprep.subr.mxu0 0.0
  %266 = vmatpush2.msra.mxu0 0.0
  %267 = vmatprep.subr.mxu0 0.0
  %268 = vmatpush2.msra.mxu0 0.0
  %269 = vmatprep.subr.mxu0 0.0
  %270 = vmatpush2.msra.mxu0 0.0
  %271 = vmatprep.subr.mxu0 0.0
  %272 = vmatpush2.msra.mxu0 0.0
  %273 = vmatprep.subr.mxu0 0.0
  %274 = vmatpush2.msra.mxu0 0.0
  %275 = vmatprep.subr.mxu0 0.0
  %276 = vmatpush2.msra.mxu0 0.0
  %277 = vmatprep.subr.mxu0 0.0
  %278 = vmatpush2.msra.mxu0 0.0
  %279 = vmatprep.subr.mxu0 0.0
  %280 = vmatpush2.msra.mxu0 0.0
  %281 = vmatprep.subr.mxu0 0.0
  %282 = vmatpush2.msra.mxu0 0.0
  %283 = vmatprep.subr.mxu0 0.0
  %284 = vmatpush2.msra.mxu0 0.0
  %285 = vmatprep.subr.mxu0 0.0
  %286 = vmatpush2.msra.mxu0 0.0
  %287 = vmatprep.subr.mxu0 0.0
  %288 = vmatpush2.msra.mxu0 0.0
  %289 = vmatprep.subr.mxu0 0.0
  %290 = vmatpush2.msra.mxu0 0.0
  %291 = vmatprep.mubr.f32.mxu0 0.0
  %292 = vmatmul.mubr.f32.gmra.mxu0 %v203
  %v293 = vpop.f32.mrf.mxu0
  %v294 = vadd.f32 %v225, %v293
  %v295 = vpop.f32.mrf.mxu0
  %296 = vdwg.mxu0
  %298 = vrot.lane.b32.xlu0 %v294, 125
  %v299 = vpop.permute.xlu0 %298
  %vm301 = vcmask 7168
  %v302 = vsel %vm301, %v299, 0.0
  %303 = vadd.xlane.f32.xlu0 %v302
  %v304 = vpop.xlane.xlu0 %303
  %v305 = vrot.slane %v304, 4
  %v306 = vadd.f32 %v304, %v305
  %v307 = vrot.slane %v306, 2
  %v308 = vadd.f32 %v306, %v307
  %v309 = vrot.slane %v308, 1
  %v310 = vadd.f32 %v308, %v309
  %s311 = vtos %v310
  %v312 = vstv %s311
  %v313 = vmul.f32 %v312, 0.041666668
  %v314 = vsub.f32 %v294, %v313
  %vm315 = vcmask 64512
  %316 = vst.msk [vmem:[%s7] sm:$0xff] %vm315, %v314
  // Predicated region
  $region30: #{dueling_q_forward.1} parent=0 // pred_check
    _
  $region31: #{dueling_q_forward.1} parent=0 // pred_check_branch
    %318 = sbr.rel (0) target = $region33
  $region32: #{dueling_q_forward.1} parent=0 // pred_region
    _
  $region33: #{dueling_q_forward.1} parent=0 // pred_fallthru
    _
  // Predicated region
  $region34: #{dueling_q_forward.1} parent=0 // pred_check
    _
  $region35: #{dueling_q_forward.1} parent=0 // pred_check_branch
    %320 = sbr.rel (0) target = $region37
  $region36: #{dueling_q_forward.1} parent=0 // pred_region
    _
  $region37: #{dueling_q_forward.1} parent=0 // pred_fallthru
    _

</llo_original>
